<compile_context>
chip_gen: v6e
topology: v6e:2x2x1
jax: 0.10.0
libtpu: 0.0.40
codegen_flags: <defaults>
</compile_context>

<pallas_src>
import functools

import jax
import jax.numpy as jnp
from jax.experimental import pallas as pl
from jax.experimental.pallas import tpu as pltpu


def _conv1x1_kernel(x_ref, w_ref, b_ref, o_ref, *, precision):
    # x_ref: (BN, C_in, T)   w_ref: (C_out, C_in)   b_ref: (C_out, 1)
    # o_ref: (BN, C_out, T)
    w = w_ref[...]
    b = b_ref[...]
    # BN is a small static int -> unrolled; each iteration is one lane-dense
    # (C_out, C_in) @ (C_in, T) MXU matmul with f32 accumulation + bias add,
    # all hidden under the tile DMA (kernel is HBM-bound).
    for i in range(x_ref.shape[0]):
        acc = jnp.dot(w, x_ref[i],
                      preferred_element_type=jnp.float32,
                      precision=precision)
        o_ref[i] = (acc + b).astype(o_ref.dtype)


def outconv_pallas(x_nchw, weight, bias, *, tile_hw=None, batch_block=None,
                   use_bf16=False):
    """1x1 Conv2d forward.

    x_nchw : (N, C_in, H, W)
    weight : (C_out, C_in, 1, 1)   (PyTorch Conv2d layout)
    bias   : (C_out,)
    returns: (N, C_out, H, W)   (bf16 if use_bf16 else x dtype)
    """
    N, C_in, H, W = x_nchw.shape
    C_out = weight.shape[0]
    HW = H * W

    compute_dtype = jnp.bfloat16 if use_bf16 else x_nchw.dtype
    itemsize = jnp.dtype(compute_dtype).itemsize
    sub = 32 // itemsize                         # sublane padding: 8 f32 / 16 bf16
    cin_p = -(-C_in // sub) * sub
    cout_p = -(-C_out // sub) * sub

    # Free (metadata-only) reshapes of contiguous NCHW data — no HBM transposes.
    x = x_nchw.reshape(N, C_in, HW).astype(compute_dtype)
    w_mat = weight.reshape(C_out, C_in).astype(compute_dtype)
    b_col = bias.reshape(C_out, 1).astype(jnp.float32)     # bias added in f32

    # ---- tiling heuristic: maximize bytes moved per grid step ---------------
    VMEM_CAP = 40 << 20            # budget for double-buffered x/out tiles
    TARGET_STEP_BYTES = 16 << 20   # amortizes ~0.35us/step even at 3.2 TB/s
    px_vmem = 2 * (cin_p + cout_p) * itemsize   # padded VMEM bytes / pixel / item
    px_hbm = (C_in + C_out) * itemsize          # HBM bytes / pixel / item

    # 1) spatial tile: as large as the VMEM budget allows (lane dim; multiple
    #    of 128 or the full extent).
    if tile_hw is None:
        tile_hw = VMEM_CAP // px_vmem
    tile_hw = min(tile_hw, HW)
    if tile_hw < HW:
        tile_hw = max((tile_hw // 128) * 128, 128)
    n_hw = pl.cdiv(HW, tile_hw)

    # 2) fold batch items into the block when H*W alone can't reach the
    #    per-step byte target (small feature maps), keeping >=2 grid steps
    #    (v7x has 2 TensorCores) and staying inside the VMEM budget.
    if batch_block is None:
        bn = 1
        for d in [d for d in range(1, min(N, 64) + 1) if N % d == 0]:
            if d * px_vmem * tile_hw > VMEM_CAP:
                break
            if (N // d) * n_hw < 2 and (N // bn) * n_hw >= 2:
                break
            bn = d
            if d * px_hbm * tile_hw >= TARGET_STEP_BYTES:
                break
    else:
        bn = batch_block
    assert N % bn == 0, (N, bn)

    # 3) if the problem still collapsed to a single step, split the spatial
    #    tile so both v7x cores get work (no-op for tiny images).
    if (N // bn) * n_hw < 2 and HW >= 256:
        tile_hw = max((pl.cdiv(HW, 2) // 128) * 128, 128)
        n_hw = pl.cdiv(HW, tile_hw)

    grid = (N // bn, n_hw)

    # Honest VMEM budget: double-buffered, sublane-padded x/out tiles plus the
    # resident weight/bias, capped safely under v7x's 64 MiB physical VMEM.
    need = bn * px_vmem * tile_hw + (1 << 20)
    vmem_limit = int(min(max(need + (8 << 20), 32 << 20), 48 << 20))

    precision = (jax.lax.Precision.HIGHEST if compute_dtype == jnp.float32
                 else jax.lax.Precision.DEFAULT)
    kernel = functools.partial(_conv1x1_kernel, precision=precision)

    out = pl.pallas_call(
        kernel,
        out_shape=jax.ShapeDtypeStruct((N, C_out, HW), compute_dtype),
        grid_spec=pltpu.PrefetchScalarGridSpec(
            num_scalar_prefetch=0,
            grid=grid,
            in_specs=[
                # activations: bn batch items, channels on sublanes, spatial on lanes
                pl.BlockSpec((bn, C_in, tile_hw), lambda n, j: (n, 0, j)),
                # weight + bias: resident across the whole grid
                pl.BlockSpec((C_out, C_in), lambda n, j: (0, 0)),
                pl.BlockSpec((C_out, 1), lambda n, j: (0, 0)),
            ],
            out_specs=pl.BlockSpec((bn, C_out, tile_hw), lambda n, j: (n, 0, j)),
        ),
        compiler_params=pltpu.CompilerParams(
            dimension_semantics=("parallel", "parallel"),
            vmem_limit_bytes=vmem_limit,
        ),
    )(x, w_mat, b_col)

    return out.reshape(N, C_out, H, W)


def _reference(x_nchw, weight, bias):
    # Pure-JAX reference for the 1x1 conv.
    w = weight.reshape(weight.shape[0], weight.shape[1])  # (C_out, C_in)
    out = jnp.einsum("nchw,oc->nohw", x_nchw, w,
                     precision=jax.lax.Precision.HIGHEST)
    return out + bias[None, :, None, None]


if __name__ == "__main__":
    key = jax.random.PRNGKey(0)
    k_x, k_w, k_b = jax.random.split(key, 3)

    N, C_in, C_out, H, W = 2, 4, 8, 16, 16

    x = jax.random.normal(k_x, (N, C_in, H, W), dtype=jnp.float32)
    # Deterministic "Conv2d-like" init (uniform in +-1/sqrt(C_in)), not a checkpoint.
    bound = 1.0 / (C_in ** 0.5)
    weight = jax.random.uniform(k_w, (C_out, C_in, 1, 1), jnp.float32, -bound, bound)
    bias = jax.random.uniform(k_b, (C_out,), jnp.float32, -bound, bound)

    out = outconv_pallas(x, weight, bias)
    out = jax.block_until_ready(out)

    ref = _reference(x, weight, bias)
    assert out.shape == (N, C_out, H, W), out.shape
    assert jnp.allclose(out, ref, atol=1e-5, rtol=1e-5), float(jnp.max(jnp.abs(out - ref)))

    print("KERNEL_OK")
</pallas_src>

<mosaic_0001>
module attributes {stable_mosaic.version = 11 : i64} {
  func.func @_conv1x1_kernel(%arg0: i32, %arg1: i32, %arg2: memref<1x4x256xf32, #tpu.memory_space<vmem>>, %arg3: memref<8x4xf32, #tpu.memory_space<vmem>>, %arg4: memref<8x1xf32, #tpu.memory_space<vmem>>, %arg5: memref<1x8x256xf32, #tpu.memory_space<vmem>>) attributes {dimension_semantics = [#tpu.dimension_semantics<parallel>, #tpu.dimension_semantics<parallel>], iteration_bounds = array<i64: 2, 1>, scalar_prefetch = 0 : i64, scratch_operands = 0 : i64, tpu.core_type = #tpu.core_type<tc>, window_params = [{transform_indices = @transform_0, window_bounds = array<i64: 1, 4, 256>}, {pipeline_mode = #tpu.pipeline_mode<synchronous>, transform_indices = @transform_1, window_bounds = array<i64: 8, 4>}, {pipeline_mode = #tpu.pipeline_mode<synchronous>, transform_indices = @transform_2, window_bounds = array<i64: 8, 1>}, {transform_indices = @transform_3, window_bounds = array<i64: 1, 8, 256>}]} {
    %c0 = arith.constant 0 : index
    %c0_0 = arith.constant 0 : index
    %0 = vector.load %arg3[%c0, %c0_0] : memref<8x4xf32, #tpu.memory_space<vmem>>, vector<8x4xf32>
    %c0_1 = arith.constant 0 : index
    %c0_2 = arith.constant 0 : index
    %1 = vector.load %arg4[%c0_1, %c0_2] : memref<8x1xf32, #tpu.memory_space<vmem>>, vector<8x1xf32>
    %c0_3 = arith.constant 0 : index
    %c0_4 = arith.constant 0 : index
    %c0_5 = arith.constant 0 : index
    %2 = vector.load %arg2[%c0_3, %c0_4, %c0_5] : memref<1x4x256xf32, #tpu.memory_space<vmem>>, vector<1x4x256xf32>
    %3 = vector.shape_cast %2 : vector<1x4x256xf32> to vector<4x256xf32>
    %cst = arith.constant dense<0.000000e+00> : vector<8x256xf32>
    %4 = tpu.matmul %0, %3, %cst {dimension_numbers = #tpu.dot_dimension_numbers<[1], [0], [0], [1], [0, 0, 1, 1], [], []>, precision = #tpu.contract_precision<fp32>} : vector<8x4xf32>, vector<4x256xf32>, vector<8x256xf32> -> vector<8x256xf32>
    %5 = vector.broadcast %1 : vector<8x1xf32> to vector<8x256xf32>
    %6 = arith.addf %4, %5 : vector<8x256xf32>
    %c0_6 = arith.constant 0 : index
    %c0_7 = arith.constant 0 : index
    %c0_8 = arith.constant 0 : index
    %7 = vector.load %arg5[%c0_6, %c0_7, %c0_8] : memref<1x8x256xf32, #tpu.memory_space<vmem>>, vector<1x8x256xf32>
    %8 = vector.shape_cast %7 : vector<1x8x256xf32> to vector<8x256xf32>
    %9 = vector.shape_cast %6 : vector<8x256xf32> to vector<1x8x256xf32>
    tpu.vector_store %arg5[%c0_6, %c0_7, %c0_8], %9 {strides = array<i32>} : memref<1x8x256xf32, #tpu.memory_space<vmem>>, vector<1x8x256xf32>,
    return
  }
  func.func @transform_0(%arg0: i32, %arg1: i32) -> (i32, i32, i32) {
    %c0_i32 = arith.constant 0 : i32
    %c0_i32_0 = arith.constant 0 : i32
    return %arg0, %c0_i32, %arg1 : i32, i32, i32
  }
  func.func @transform_1(%arg0: i32, %arg1: i32) -> (i32, i32) {
    %c0_i32 = arith.constant 0 : i32
    %c0_i32_0 = arith.constant 0 : i32
    %c0_i32_1 = arith.constant 0 : i32
    return %c0_i32, %c0_i32_0 : i32, i32
  }
  func.func @transform_2(%arg0: i32, %arg1: i32) -> (i32, i32) {
    %c0_i32 = arith.constant 0 : i32
    %c0_i32_0 = arith.constant 0 : i32
    %c0_i32_1 = arith.constant 0 : i32
    return %c0_i32, %c0_i32_0 : i32, i32
  }
  func.func @transform_3(%arg0: i32, %arg1: i32) -> (i32, i32, i32) {
    %c0_i32 = arith.constant 0 : i32
    %c0_i32_0 = arith.constant 0 : i32
    return %arg0, %c0_i32, %arg1 : i32, i32, i32
  }
}

</mosaic_0001>

<llo_original>
// kernel: tpu_custom_call.1
$region0: #{tpu_custom_call.1}
  #allocation0 [shape = 'u32[]', space=smem, size = 0x4, offset = 0x4, fixed_abs, tag = 'smem constant byte address 0x4 - core index']
  #allocation1 [shape = 'u32[144,128]{1,0:T(1,128)}', space=vmem, size = 0x12000, scoped, tag = 'internal scratch']
  %s0 = inlined_call_operand.vmem [shape: f32[2,4,256], index: 0, kind: input, shape index: {}]
  %s1 = inlined_call_operand.vmem [shape: f32[8,4], index: 1, kind: input, shape index: {}]
  %s2 = inlined_call_operand.vmem [shape: f32[8,1], index: 2, kind: input, shape index: {}]
  %s3 = inlined_call_operand.hbm [shape: f32[2,8,256], index: 3, kind: output, shape index: {}]
  %s4 = sld [smem:[#allocation0]]
  $region45: #{tpu_custom_call.1} parent=0
    _
  %s6 = ssub.s32 1, %s4
  %s7 = scalar_select 0, %s6, %s4
  $region1: #{tpu_custom_call.1} parent=0
    #allocation2 [shape = 'u8[16384]{0}', space=vmem, size = 0x4000, scoped, tag = 'output window, operand 0']
    #allocation3 [shape = 's32[2]{0}', space=sflag, size = 0x8, scoped, tag = 'scoped memory for tpu_custom_call.1']
    %8 = vsyncpa [#allocation3], 0
    %s9 = scalar_lea.sflag [#allocation3], 1
    %10 = vsyncpa %s9, 0
    loop: start=0, step=1, limit=4
    $region2: #{tpu_custom_call.1} parent=1 // loop_pre_header
      _
    $region3: #{tpu_custom_call.1} parent=1 // loop_header
      %s12 = sphi 0, %s16
      %p13 = scmp.ge.s32.totalorder %s12, 4
      %s19 = sphi 0, %s31
      %s20 = sphi 0, %s27
      %s21 = sphi 0, %s19
      %s22 = sphi 0, %s20
      %s23 = sphi 0, %s21
      %s24 = sphi 0, %s22
      %s36 = sphi 0, %s38
      %s39 = sphi 0, %s36
      %s40 = sphi 0, %s39
      %s56 = sphi 0, %s40
      %s60 = sphi 0, %s60
      %s62 = sphi 0, %s60
      %s63 = sphi 0, %s62
      %s77 = sphi 0, %s63
      %s81 = sphi 0, %s81
      %s83 = sphi 0, %s81
      %s84 = sphi 0, %s83
      %s98 = sphi 0, %s84
      %s106 = sphi 0, %s108
      %s109 = sphi 0, %s106
      %s110 = sphi 0, %s109
      %s126 = sphi 0, %s110
    $region4: #{tpu_custom_call.1} parent=1 // loop_header_branch
      %15 = sbr.rel (%p13) target = $region8
    $region5: #{tpu_custom_call.1} parent=1 // loop_body
      %s17 = ssub.s32 %s12, 1
      %s18 = ssub.s32 %s12, 2
      %s25 = sadd.s32 1, %s20
      %p26 = scmp.ge.s32.totalorder %s25, 1
      %s27 = scalar_select %p26, 0, %s25
      %s28 = sadd.s32 1, %s19
      %s29 = scalar_select %p26, %s28, %s19
      %p30 = scmp.ge.s32.totalorder %s29, 2
      %s31 = scalar_select %p30, 0, %s29
      %s32 = ssub.s32 %s19, %s31
      %s33 = ssub.s32 %s20, %s27
      %s34 = sor.u32 %s32, %s33
      %p35 = scmp.eq.s32.totalorder %s34, 0
      %s37 = sadd.s32 %s36, 1
      %s38 = scalar_select %p35, %s36, %s37
      %p41 = pneg %p35
      %p42 = scmp.eq.s32.totalorder %s12, 1
      %p43 = por %p41, %p42
      %p44 = scmp.ne.s32.totalorder %s36, %s39
      %p45 = scmp.eq.s32.totalorder %s12, 0
      %p46 = por %p44, %p45
      %p47 = scmp.ne.s32.totalorder %s36, %s39
      %p48 = scmp.eq.s32.totalorder %s17, 1
      %p49 = por %p47, %p48
      %p50 = scmp.ne.s32.totalorder %s39, %s40
      %p51 = scmp.eq.s32.totalorder %s17, 0
      %p52 = por %p50, %p51
      %p53 = scmp.ne.s32.totalorder %s39, %s40
      %p54 = scmp.eq.s32.totalorder %s18, 1
      %p55 = por %p53, %p54
      %p57 = scmp.ne.s32.totalorder %s40, %s56
      %p58 = scmp.eq.s32.totalorder %s18, 0
      %p59 = por %p57, %p58
      %s61 = sadd.s32 %s60, 1
      %p64 = scmp.eq.s32.totalorder %s12, 1
      %p65 = scmp.ne.s32.totalorder %s60, %s62
      %p66 = scmp.eq.s32.totalorder %s12, 0
      %p67 = por %p65, %p66
      %p68 = scmp.ne.s32.totalorder %s60, %s62
      %p69 = scmp.eq.s32.totalorder %s17, 1
      %p70 = por %p68, %p69
      %p71 = scmp.ne.s32.totalorder %s62, %s63
      %p72 = scmp.eq.s32.totalorder %s17, 0
      %p73 = por %p71, %p72
      %p74 = scmp.ne.s32.totalorder %s62, %s63
      %p75 = scmp.eq.s32.totalorder %s18, 1
      %p76 = por %p74, %p75
      %p78 = scmp.ne.s32.totalorder %s63, %s77
      %p79 = scmp.eq.s32.totalorder %s18, 0
      %p80 = por %p78, %p79
      %s82 = sadd.s32 %s81, 1
      %p85 = scmp.eq.s32.totalorder %s12, 1
      %p86 = scmp.ne.s32.totalorder %s81, %s83
      %p87 = scmp.eq.s32.totalorder %s12, 0
      %p88 = por %p86, %p87
      %p89 = scmp.ne.s32.totalorder %s81, %s83
      %p90 = scmp.eq.s32.totalorder %s17, 1
      %p91 = por %p89, %p90
      %p92 = scmp.ne.s32.totalorder %s83, %s84
      %p93 = scmp.eq.s32.totalorder %s17, 0
      %p94 = por %p92, %p93
      %p95 = scmp.ne.s32.totalorder %s83, %s84
      %p96 = scmp.eq.s32.totalorder %s18, 1
      %p97 = por %p95, %p96
      %p99 = scmp.ne.s32.totalorder %s84, %s98
      %p100 = scmp.eq.s32.totalorder %s18, 0
      %p101 = por %p99, %p100
      %s102 = ssub.s32 %s19, %s31
      %s103 = ssub.s32 %s20, %s27
      %s104 = sor.u32 %s102, %s103
      %p105 = scmp.eq.s32.totalorder %s104, 0
      %s107 = sadd.s32 %s106, 1
      %s108 = scalar_select %p105, %s106, %s107
      %p111 = pneg %p105
      %p112 = scmp.eq.s32.totalorder %s12, 1
      %p113 = por %p111, %p112
      %p114 = scmp.ne.s32.totalorder %s106, %s109
      %p115 = scmp.eq.s32.totalorder %s12, 0
      %p116 = por %p114, %p115
      %p117 = scmp.ne.s32.totalorder %s106, %s109
      %p118 = scmp.eq.s32.totalorder %s17, 1
      %p119 = por %p117, %p118
      %p120 = scmp.ne.s32.totalorder %s109, %s110
      %p121 = scmp.eq.s32.totalorder %s17, 0
      %p122 = por %p120, %p121
      %p123 = scmp.ne.s32.totalorder %s109, %s110
      %p124 = scmp.eq.s32.totalorder %s18, 1
      %p125 = por %p123, %p124
      %p127 = scmp.ne.s32.totalorder %s110, %s126
      %p128 = scmp.eq.s32.totalorder %s18, 0
      %p129 = por %p127, %p128
      %p130 = scmp.le.s32.totalorder 1, %s12
      %p131 = scmp.lt.s32.totalorder %s12, 3
      %p132 = pnand %p130, %p131
      %p133 = pneg %p132
      // Predicated region
      $region9: #{tpu_custom_call.1} parent=5 // pred_check
        _
      $region10: #{tpu_custom_call.1} parent=5 // pred_check_branch
        %135 = sbr.rel (%p132) target = $region12
      $region11: #{tpu_custom_call.1} parent=5 // pred_region
        %s136 = ssub.s32 %s12, 1
        // Predicated region
        $region13: #{tpu_custom_call.1} parent=11 // pred_check
          %p137 = pneg %p73
        $region14: #{tpu_custom_call.1} parent=11 // pred_check_branch
          %139 = sbr.rel (%p137) target = $region16
        $region15: #{tpu_custom_call.1} parent=11 // pred_region
          _
        $region16: #{tpu_custom_call.1} parent=11 // pred_fallthru
          _
        // Predicated region
        $region17: #{tpu_custom_call.1} parent=11 // pred_check
          %p140 = pneg %p94
        $region18: #{tpu_custom_call.1} parent=11 // pred_check_branch
          %142 = sbr.rel (%p140) target = $region20
        $region19: #{tpu_custom_call.1} parent=11 // pred_region
          _
        $region20: #{tpu_custom_call.1} parent=11 // pred_fallthru
          _
      $region12: #{tpu_custom_call.1} parent=5 // pred_fallthru
        _
      %p143 = scmp.lt.s32.totalorder %s12, 2
      // Predicated region
      $region21: #{tpu_custom_call.1} parent=5 // pred_check
        %p144 = pneg %p143
      $region22: #{tpu_custom_call.1} parent=5 // pred_check_branch
        %146 = sbr.rel (%p144) target = $region24
      $region23: #{tpu_custom_call.1} parent=5 // pred_region
        // Predicated region
        $region25: #{tpu_custom_call.1} parent=23 // pred_check
          %p147 = pneg %p46
        $region26: #{tpu_custom_call.1} parent=23 // pred_check_branch
          %149 = sbr.rel (%p147) target = $region28
        $region27: #{tpu_custom_call.1} parent=23 // pred_region
          %s150 = smul.u32 2, %s20
          %p151 = scmp.lt.s32.totalorder %s19, 1
          %s152 = scalar_select %p151, %s19, 1
          %p153 = scmp.lt.s32.totalorder %s150, 1
          %s154 = scalar_select %p153, %s150, 1
          %s155 = smul.addr %s152, 2
          %s156 = sadd.s32 %s154, %s155
          %s157 = smul.addr %s156, 4
          %s158 = scalar_lea.vmem %s0, %s157
          %s159 = smul.u32 2, %s20
        $region28: #{tpu_custom_call.1} parent=23 // pred_fallthru
          _
      $region24: #{tpu_custom_call.1} parent=5 // pred_fallthru
        _
      %p160 = scmp.le.s32.totalorder 1, %s12
      %p161 = scmp.lt.s32.totalorder %s12, 3
      %p162 = pnand %p160, %p161
      %p163 = pneg %p162
      // Predicated region
      $region29: #{tpu_custom_call.1} parent=5 // pred_check
        _
      $region30: #{tpu_custom_call.1} parent=5 // pred_check_branch
        %165 = sbr.rel (%p162) target = $region32
      $region31: #{tpu_custom_call.1} parent=5 // pred_region
        %s166 = ssub.s32 %s12, 1
        %s167 = smul.u32 2, %s22
        %p168 = scmp.lt.s32.totalorder %s21, 1
        %s169 = scalar_select %p168, %s21, 1
        %p170 = scmp.lt.s32.totalorder %s167, 1
        %s171 = scalar_select %p170, %s167, 1
        %s172 = smul.addr %s169, 2
        %s173 = sadd.s32 %s171, %s172
        %s174 = smul.addr %s173, 4
        %s175 = scalar_lea.vmem %s0, %s174
        %p176 = pneg %p52
        %p177 = pneg %p49
        %p178 = pneg %p73
        %p179 = pneg %p70
        %p180 = pneg %p94
        %p181 = pneg %p91
        %p182 = pneg %p122
        %p183 = pneg %p119
        %s184 = sand.u32 %s109, 1
        %s185 = scalar_lea.sflag [#allocation3], %s184
        %s186 = sand.u32 %s109, 1
        %s187 = smul.addr %s186, 16
        %s188 = scalar_lea.vmem [#allocation2], %s187
        %s189 = smul.u32 2, %s22
        %p190 = scmp.lt.s32.totalorder %s21, 1
        %s191 = scalar_select %p190, %s21, 1
        %p192 = scmp.lt.s32.totalorder %s189, 1
        %s193 = scalar_select %p192, %s189, 1
        %s194 = smul.addr %s191, 2
        %s195 = sadd.s32 %s193, %s194
        %s196 = smul.addr %s195, 4
        %s197 = scalar_lea.vmem %s0, %s196
        %s198 = smul.u32 2, %s22
        %s199 = smul.u32 2, %s22
        %v200 = vld [vmem:[%s1] sm:$0xff]
        %v201 = vld [vmem:[%s2] sm:$0xff]
        %v202 = vld [vmem:[%s197] sm:$0xff]
        %204 = vset.pattern.permute.xlu0 0
        %205 = vperm.xlu0 %204, %v201
        %v206 = vpop.permute.xlu0 %205
        %v209 = vcombine.high %v202, %v202
        %vm210 = vcmask 31744
        %v212 = vsel %vm210, %v200, 0
        %vm214 = vcmask 1043456
        %v215 = vsel %vm214, %v202, 0
        %v217 = vsel %vm214, %v209, 0
        %219 = vmatprep.subr.mxu0 0.0
        %220 = vmatpush1.msra.mxu0 0.0
        %221 = vmatprep.subr.mxu0 0.0
        %222 = vmatpush1.msra.mxu0 0.0
        %223 = vmatprep.subr.mxu0 0.0
        %224 = vmatpush1.msra.mxu0 0.0
        %225 = vmatprep.subr.mxu0 0.0
        %226 = vmatpush1.msra.mxu0 0.0
        %227 = vmatprep.subr.mxu0 0.0
        %228 = vmatpush1.msra.mxu0 0.0
        %229 = vmatprep.subr.mxu0 0.0
        %230 = vmatpush1.msra.mxu0 0.0
        %231 = vmatprep.subr.mxu0 0.0
        %232 = vmatpush1.msra.mxu0 0.0
        %233 = vmatprep.subr.mxu0 0.0
        %234 = vmatpush1.msra.mxu0 0.0
        %235 = vmatprep.subr.mxu0 0.0
        %236 = vmatpush1.msra.mxu0 0.0
        %237 = vmatprep.subr.mxu0 0.0
        %238 = vmatpush1.msra.mxu0 0.0
        %239 = vmatprep.subr.mxu0 0.0
        %240 = vmatpush1.msra.mxu0 0.0
        %241 = vmatprep.subr.mxu0 0.0
        %242 = vmatpush1.msra.mxu0 0.0
        %243 = vmatprep.subr.mxu0 0.0
        %244 = vmatpush1.msra.mxu0 0.0
        %245 = vmatprep.subr.mxu0 0.0
        %246 = vmatpush1.msra.mxu0 0.0
        %247 = vmatprep.subr.mxu0 0.0
        %248 = vmatpush1.msra.mxu0 0.0
        %v249 = vand.u32 %v217, 4294901760
        %250 = vmatprep.subr.mxu0 %v249
        %v251 = vand.u32 %v215, 4294901760
        %252 = vmatpush1.msra.mxu0 %v251
        %253 = vmatprep.subr.mxu0 0.0
        %254 = vmatpush2.msra.mxu0 0.0
        %255 = vmatprep.subr.mxu0 0.0
        %256 = vmatpush2.msra.mxu0 0.0
        %257 = vmatprep.subr.mxu0 0.0
        %258 = vmatpush2.msra.mxu0 0.0
        %259 = vmatprep.subr.mxu0 0.0
        %260 = vmatpush2.msra.mxu0 0.0
        %261 = vmatprep.subr.mxu0 0.0
        %262 = vmatpush2.msra.mxu0 0.0
        %263 = vmatprep.subr.mxu0 0.0
        %264 = vmatpush2.msra.mxu0 0.0
        %265 = vmatprep.subr.mxu0 0.0
        %266 = vmatpush2.msra.mxu0 0.0
        %267 = vmatprep.subr.mxu0 0.0
        %268 = vmatpush2.msra.mxu0 0.0
        %269 = vmatprep.subr.mxu0 0.0
        %270 = vmatpush2.msra.mxu0 0.0
        %271 = vmatprep.subr.mxu0 0.0
        %272 = vmatpush2.msra.mxu0 0.0
        %273 = vmatprep.subr.mxu0 0.0
        %274 = vmatpush2.msra.mxu0 0.0
        %275 = vmatprep.subr.mxu0 0.0
        %276 = vmatpush2.msra.mxu0 0.0
        %277 = vmatprep.subr.mxu0 0.0
        %278 = vmatpush2.msra.mxu0 0.0
        %279 = vmatprep.subr.mxu0 0.0
        %280 = vmatpush2.msra.mxu0 0.0
        %281 = vmatprep.subr.mxu0 0.0
        %282 = vmatpush2.msra.mxu0 0.0
        %283 = vmatprep.subr.mxu0 0.0
        %284 = vmatpush2.msra.mxu0 0.0
        %285 = vmatprep.mubr.f32.mxu0 0.0
        %v286 = vand.u32 %v212, 4294901760
        %v287 = vsub.f32 %v212, %v286
        %v288 = vand.u32 %v287, 4294901760
        %v289 = vsub.f32 %v287, %v288
        %v290 = vand.u32 %v289, 4294901760
        %291 = vmatmul.mubr.f32.gmra.mxu0 %v290
        %v292 = vpop.f32.mrf.mxu0
        %v293 = vadd.f32 %v206, %v292
        %v294 = vpop.f32.mrf.mxu0
        %v295 = vadd.f32 %v206, %v294
        %296 = vdwg.mxu0
        %297 = vmatprep.subr.mxu0 0.0
        %298 = vmatpush1.msra.mxu0 0.0
        %299 = vmatprep.subr.mxu0 0.0
        %300 = vmatpush1.msra.mxu0 0.0
        %301 = vmatprep.subr.mxu0 0.0
        %302 = vmatpush1.msra.mxu0 0.0
        %303 = vmatprep.subr.mxu0 0.0
        %304 = vmatpush1.msra.mxu0 0.0
        %305 = vmatprep.subr.mxu0 0.0
        %306 = vmatpush1.msra.mxu0 0.0
        %307 = vmatprep.subr.mxu0 0.0
        %308 = vmatpush1.msra.mxu0 0.0
        %309 = vmatprep.subr.mxu0 0.0
        %310 = vmatpush1.msra.mxu0 0.0
        %311 = vmatprep.subr.mxu0 0.0
        %312 = vmatpush1.msra.mxu0 0.0
        %313 = vmatprep.subr.mxu0 0.0
        %314 = vmatpush1.msra.mxu0 0.0
        %315 = vmatprep.subr.mxu0 0.0
        %316 = vmatpush1.msra.mxu0 0.0
        %317 = vmatprep.subr.mxu0 0.0
        %318 = vmatpush1.msra.mxu0 0.0
        %319 = vmatprep.subr.mxu0 0.0
        %320 = vmatpush1.msra.mxu0 0.0
        %321 = vmatprep.subr.mxu0 0.0
        %322 = vmatpush1.msra.mxu0 0.0
        %323 = vmatprep.subr.mxu0 0.0
        %324 = vmatpush1.msra.mxu0 0.0
        %325 = vmatprep.subr.mxu0 0.0
        %326 = vmatpush1.msra.mxu0 0.0
        %v327 = vand.u32 %v217, 4294901760
        %v328 = vsub.f32 %v217, %v327
        %v329 = vand.u32 %v328, 4294901760
        %v330 = vsub.f32 %v328, %v329
        %v331 = vand.u32 %v330, 4294901760
        %332 = vmatprep.subr.mxu0 %v331
        %v333 = vand.u32 %v215, 4294901760
        %v334 = vsub.f32 %v215, %v333
        %v335 = vand.u32 %v334, 4294901760
        %v336 = vsub.f32 %v334, %v335
        %v337 = vand.u32 %v336, 4294901760
        %338 = vmatpush1.msra.mxu0 %v337
        %339 = vmatprep.subr.mxu0 0.0
        %340 = vmatpush2.msra.mxu0 0.0
        %341 = vmatprep.subr.mxu0 0.0
        %342 = vmatpush2.msra.mxu0 0.0
        %343 = vmatprep.subr.mxu0 0.0
        %344 = vmatpush2.msra.mxu0 0.0
        %345 = vmatprep.subr.mxu0 0.0
        %346 = vmatpush2.msra.mxu0 0.0
        %347 = vmatprep.subr.mxu0 0.0
        %348 = vmatpush2.msra.mxu0 0.0
        %349 = vmatprep.subr.mxu0 0.0
        %350 = vmatpush2.msra.mxu0 0.0
        %351 = vmatprep.subr.mxu0 0.0
        %352 = vmatpush2.msra.mxu0 0.0
        %353 = vmatprep.subr.mxu0 0.0
        %354 = vmatpush2.msra.mxu0 0.0
        %355 = vmatprep.subr.mxu0 0.0
        %356 = vmatpush2.msra.mxu0 0.0
        %357 = vmatprep.subr.mxu0 0.0
        %358 = vmatpush2.msra.mxu0 0.0
        %359 = vmatprep.subr.mxu0 0.0
        %360 = vmatpush2.msra.mxu0 0.0
        %361 = vmatprep.subr.mxu0 0.0
        %362 = vmatpush2.msra.mxu0 0.0
        %363 = vmatprep.subr.mxu0 0.0
        %364 = vmatpush2.msra.mxu0 0.0
        %365 = vmatprep.subr.mxu0 0.0
        %366 = vmatpush2.msra.mxu0 0.0
        %367 = vmatprep.subr.mxu0 0.0
        %368 = vmatpush2.msra.mxu0 0.0
        %369 = vmatprep.subr.mxu0 0.0
        %370 = vmatpush2.msra.mxu0 0.0
        %371 = vmatprep.mubr.f32.mxu0 0.0
        %v372 = vand.u32 %v212, 4294901760
        %373 = vmatmul.mubr.f32.gmra.mxu0 %v372
        %v374 = vpop.f32.mrf.mxu0
        %v375 = vadd.f32 %v293, %v374
        %v376 = vpop.f32.mrf.mxu0
        %v377 = vadd.f32 %v295, %v376
        %378 = vdwg.mxu0
        %379 = vmatprep.subr.mxu0 0.0
        %380 = vmatpush1.msra.mxu0 0.0
        %381 = vmatprep.subr.mxu0 0.0
        %382 = vmatpush1.msra.mxu0 0.0
        %383 = vmatprep.subr.mxu0 0.0
        %384 = vmatpush1.msra.mxu0 0.0
        %385 = vmatprep.subr.mxu0 0.0
        %386 = vmatpush1.msra.mxu0 0.0
        %387 = vmatprep.subr.mxu0 0.0
        %388 = vmatpush1.msra.mxu0 0.0
        %389 = vmatprep.subr.mxu0 0.0
        %390 = vmatpush1.msra.mxu0 0.0
        %391 = vmatprep.subr.mxu0 0.0
        %392 = vmatpush1.msra.mxu0 0.0
        %393 = vmatprep.subr.mxu0 0.0
        %394 = vmatpush1.msra.mxu0 0.0
        %395 = vmatprep.subr.mxu0 0.0
        %396 = vmatpush1.msra.mxu0 0.0
        %397 = vmatprep.subr.mxu0 0.0
        %398 = vmatpush1.msra.mxu0 0.0
        %399 = vmatprep.subr.mxu0 0.0
        %400 = vmatpush1.msra.mxu0 0.0
        %401 = vmatprep.subr.mxu0 0.0
        %402 = vmatpush1.msra.mxu0 0.0
        %403 = vmatprep.subr.mxu0 0.0
        %404 = vmatpush1.msra.mxu0 0.0
        %405 = vmatprep.subr.mxu0 0.0
        %406 = vmatpush1.msra.mxu0 0.0
        %407 = vmatprep.subr.mxu0 0.0
        %408 = vmatpush1.msra.mxu0 0.0
        %v409 = vand.u32 %v217, 4294901760
        %v410 = vsub.f32 %v217, %v409
        %411 = vmatprep.subr.mxu0 %v410
        %v412 = vand.u32 %v215, 4294901760
        %v413 = vsub.f32 %v215, %v412
        %414 = vmatpush1.msra.mxu0 %v413
        %415 = vmatprep.subr.mxu0 0.0
        %416 = vmatpush2.msra.mxu0 0.0
        %417 = vmatprep.subr.mxu0 0.0
        %418 = vmatpush2.msra.mxu0 0.0
        %419 = vmatprep.subr.mxu0 0.0
        %420 = vmatpush2.msra.mxu0 0.0
        %421 = vmatprep.subr.mxu0 0.0
        %422 = vmatpush2.msra.mxu0 0.0
        %423 = vmatprep.subr.mxu0 0.0
        %424 = vmatpush2.msra.mxu0 0.0
        %425 = vmatprep.subr.mxu0 0.0
        %426 = vmatpush2.msra.mxu0 0.0
        %427 = vmatprep.subr.mxu0 0.0
        %428 = vmatpush2.msra.mxu0 0.0
        %429 = vmatprep.subr.mxu0 0.0
        %430 = vmatpush2.msra.mxu0 0.0
        %431 = vmatprep.subr.mxu0 0.0
        %432 = vmatpush2.msra.mxu0 0.0
        %433 = vmatprep.subr.mxu0 0.0
        %434 = vmatpush2.msra.mxu0 0.0
        %435 = vmatprep.subr.mxu0 0.0
        %436 = vmatpush2.msra.mxu0 0.0
        %437 = vmatprep.subr.mxu0 0.0
        %438 = vmatpush2.msra.mxu0 0.0
        %439 = vmatprep.subr.mxu0 0.0
        %440 = vmatpush2.msra.mxu0 0.0
        %441 = vmatprep.subr.mxu0 0.0
        %442 = vmatpush2.msra.mxu0 0.0
        %443 = vmatprep.subr.mxu0 0.0
        %444 = vmatpush2.msra.mxu0 0.0
        %445 = vmatprep.subr.mxu0 0.0
        %446 = vmatpush2.msra.mxu0 0.0
        %447 = vmatprep.mubr.f32.mxu0 0.0
        %v448 = vand.u32 %v212, 4294901760
        %v449 = vsub.f32 %v212, %v448
        %450 = vmatmul.mubr.f32.gmra.mxu0 %v449
        %v451 = vpop.f32.mrf.mxu0
        %v452 = vadd.f32 %v375, %v451
        %v453 = vpop.f32.mrf.mxu0
        %v454 = vadd.f32 %v377, %v453
        %455 = vdwg.mxu0
        %456 = vmatprep.subr.mxu0 0.0
        %457 = vmatpush1.msra.mxu0 0.0
        %458 = vmatprep.subr.mxu0 0.0
        %459 = vmatpush1.msra.mxu0 0.0
        %460 = vmatprep.subr.mxu0 0.0
        %461 = vmatpush1.msra.mxu0 0.0
        %462 = vmatprep.subr.mxu0 0.0
        %463 = vmatpush1.msra.mxu0 0.0
        %464 = vmatprep.subr.mxu0 0.0
        %465 = vmatpush1.msra.mxu0 0.0
        %466 = vmatprep.subr.mxu0 0.0
        %467 = vmatpush1.msra.mxu0 0.0
        %468 = vmatprep.subr.mxu0 0.0
        %469 = vmatpush1.msra.mxu0 0.0
        %470 = vmatprep.subr.mxu0 0.0
        %471 = vmatpush1.msra.mxu0 0.0
        %472 = vmatprep.subr.mxu0 0.0
        %473 = vmatpush1.msra.mxu0 0.0
        %474 = vmatprep.subr.mxu0 0.0
        %475 = vmatpush1.msra.mxu0 0.0
        %476 = vmatprep.subr.mxu0 0.0
        %477 = vmatpush1.msra.mxu0 0.0
        %478 = vmatprep.subr.mxu0 0.0
        %479 = vmatpush1.msra.mxu0 0.0
        %480 = vmatprep.subr.mxu0 0.0
        %481 = vmatpush1.msra.mxu0 0.0
        %482 = vmatprep.subr.mxu0 0.0
        %483 = vmatpush1.msra.mxu0 0.0
        %484 = vmatprep.subr.mxu0 0.0
        %485 = vmatpush1.msra.mxu0 0.0
        %v486 = vand.u32 %v217, 4294901760
        %487 = vmatprep.subr.mxu0 %v486
        %v488 = vand.u32 %v215, 4294901760
        %489 = vmatpush1.msra.mxu0 %v488
        %490 = vmatprep.subr.mxu0 0.0
        %491 = vmatpush2.msra.mxu0 0.0
        %492 = vmatprep.subr.mxu0 0.0
        %493 = vmatpush2.msra.mxu0 0.0
        %494 = vmatprep.subr.mxu0 0.0
        %495 = vmatpush2.msra.mxu0 0.0
        %496 = vmatprep.subr.mxu0 0.0
        %497 = vmatpush2.msra.mxu0 0.0
        %498 = vmatprep.subr.mxu0 0.0
        %499 = vmatpush2.msra.mxu0 0.0
        %500 = vmatprep.subr.mxu0 0.0
        %501 = vmatpush2.msra.mxu0 0.0
        %502 = vmatprep.subr.mxu0 0.0
        %503 = vmatpush2.msra.mxu0 0.0
        %504 = vmatprep.subr.mxu0 0.0
        %505 = vmatpush2.msra.mxu0 0.0
        %506 = vmatprep.subr.mxu0 0.0
        %507 = vmatpush2.msra.mxu0 0.0
        %508 = vmatprep.subr.mxu0 0.0
        %509 = vmatpush2.msra.mxu0 0.0
        %510 = vmatprep.subr.mxu0 0.0
        %511 = vmatpush2.msra.mxu0 0.0
        %512 = vmatprep.subr.mxu0 0.0
        %513 = vmatpush2.msra.mxu0 0.0
        %514 = vmatprep.subr.mxu0 0.0
        %515 = vmatpush2.msra.mxu0 0.0
        %516 = vmatprep.subr.mxu0 0.0
        %517 = vmatpush2.msra.mxu0 0.0
        %518 = vmatprep.subr.mxu0 0.0
        %519 = vmatpush2.msra.mxu0 0.0
        %520 = vmatprep.subr.mxu0 0.0
        %521 = vmatpush2.msra.mxu0 0.0
        %522 = vmatprep.mubr.f32.mxu0 0.0
        %v523 = vand.u32 %v212, 4294901760
        %v524 = vsub.f32 %v212, %v523
        %v525 = vand.u32 %v524, 4294901760
        %526 = vmatmul.mubr.f32.gmra.mxu0 %v525
        %v527 = vpop.f32.mrf.mxu0
        %v528 = vadd.f32 %v452, %v527
        %v529 = vpop.f32.mrf.mxu0
        %v530 = vadd.f32 %v454, %v529
        %531 = vdwg.mxu0
        %532 = vmatprep.subr.mxu0 0.0
        %533 = vmatpush1.msra.mxu0 0.0
        %534 = vmatprep.subr.mxu0 0.0
        %535 = vmatpush1.msra.mxu0 0.0
        %536 = vmatprep.subr.mxu0 0.0
        %537 = vmatpush1.msra.mxu0 0.0
        %538 = vmatprep.subr.mxu0 0.0
        %539 = vmatpush1.msra.mxu0 0.0
        %540 = vmatprep.subr.mxu0 0.0
        %541 = vmatpush1.msra.mxu0 0.0
        %542 = vmatprep.subr.mxu0 0.0
        %543 = vmatpush1.msra.mxu0 0.0
        %544 = vmatprep.subr.mxu0 0.0
        %545 = vmatpush1.msra.mxu0 0.0
        %546 = vmatprep.subr.mxu0 0.0
        %547 = vmatpush1.msra.mxu0 0.0
        %548 = vmatprep.subr.mxu0 0.0
        %549 = vmatpush1.msra.mxu0 0.0
        %550 = vmatprep.subr.mxu0 0.0
        %551 = vmatpush1.msra.mxu0 0.0
        %552 = vmatprep.subr.mxu0 0.0
        %553 = vmatpush1.msra.mxu0 0.0
        %554 = vmatprep.subr.mxu0 0.0
        %555 = vmatpush1.msra.mxu0 0.0
        %556 = vmatprep.subr.mxu0 0.0
        %557 = vmatpush1.msra.mxu0 0.0
        %558 = vmatprep.subr.mxu0 0.0
        %559 = vmatpush1.msra.mxu0 0.0
        %560 = vmatprep.subr.mxu0 0.0
        %561 = vmatpush1.msra.mxu0 0.0
        %v562 = vand.u32 %v217, 4294901760
        %v563 = vsub.f32 %v217, %v562
        %v564 = vand.u32 %v563, 4294901760
        %565 = vmatprep.subr.mxu0 %v564
        %v566 = vand.u32 %v215, 4294901760
        %v567 = vsub.f32 %v215, %v566
        %v568 = vand.u32 %v567, 4294901760
        %569 = vmatpush1.msra.mxu0 %v568
        %570 = vmatprep.subr.mxu0 0.0
        %571 = vmatpush2.msra.mxu0 0.0
        %572 = vmatprep.subr.mxu0 0.0
        %573 = vmatpush2.msra.mxu0 0.0
        %574 = vmatprep.subr.mxu0 0.0
        %575 = vmatpush2.msra.mxu0 0.0
        %576 = vmatprep.subr.mxu0 0.0
        %577 = vmatpush2.msra.mxu0 0.0
        %578 = vmatprep.subr.mxu0 0.0
        %579 = vmatpush2.msra.mxu0 0.0
        %580 = vmatprep.subr.mxu0 0.0
        %581 = vmatpush2.msra.mxu0 0.0
        %582 = vmatprep.subr.mxu0 0.0
        %583 = vmatpush2.msra.mxu0 0.0
        %584 = vmatprep.subr.mxu0 0.0
        %585 = vmatpush2.msra.mxu0 0.0
        %586 = vmatprep.subr.mxu0 0.0
        %587 = vmatpush2.msra.mxu0 0.0
        %588 = vmatprep.subr.mxu0 0.0
        %589 = vmatpush2.msra.mxu0 0.0
        %590 = vmatprep.subr.mxu0 0.0
        %591 = vmatpush2.msra.mxu0 0.0
        %592 = vmatprep.subr.mxu0 0.0
        %593 = vmatpush2.msra.mxu0 0.0
        %594 = vmatprep.subr.mxu0 0.0
        %595 = vmatpush2.msra.mxu0 0.0
        %596 = vmatprep.subr.mxu0 0.0
        %597 = vmatpush2.msra.mxu0 0.0
        %598 = vmatprep.subr.mxu0 0.0
        %599 = vmatpush2.msra.mxu0 0.0
        %600 = vmatprep.subr.mxu0 0.0
        %601 = vmatpush2.msra.mxu0 0.0
        %602 = vmatprep.mubr.f32.mxu0 0.0
        %v603 = vand.u32 %v212, 4294901760
        %604 = vmatmul.mubr.f32.gmra.mxu0 %v603
        %v605 = vpop.f32.mrf.mxu0
        %v606 = vadd.f32 %v528, %v605
        %v607 = vpop.f32.mrf.mxu0
        %v608 = vadd.f32 %v530, %v607
        %609 = vdwg.mxu0
        %610 = vmatprep.subr.mxu0 0.0
        %611 = vmatpush1.msra.mxu0 0.0
        %612 = vmatprep.subr.mxu0 0.0
        %613 = vmatpush1.msra.mxu0 0.0
        %614 = vmatprep.subr.mxu0 0.0
        %615 = vmatpush1.msra.mxu0 0.0
        %616 = vmatprep.subr.mxu0 0.0
        %617 = vmatpush1.msra.mxu0 0.0
        %618 = vmatprep.subr.mxu0 0.0
        %619 = vmatpush1.msra.mxu0 0.0
        %620 = vmatprep.subr.mxu0 0.0
        %621 = vmatpush1.msra.mxu0 0.0
        %622 = vmatprep.subr.mxu0 0.0
        %623 = vmatpush1.msra.mxu0 0.0
        %624 = vmatprep.subr.mxu0 0.0
        %625 = vmatpush1.msra.mxu0 0.0
        %626 = vmatprep.subr.mxu0 0.0
        %627 = vmatpush1.msra.mxu0 0.0
        %628 = vmatprep.subr.mxu0 0.0
        %629 = vmatpush1.msra.mxu0 0.0
        %630 = vmatprep.subr.mxu0 0.0
        %631 = vmatpush1.msra.mxu0 0.0
        %632 = vmatprep.subr.mxu0 0.0
        %633 = vmatpush1.msra.mxu0 0.0
        %634 = vmatprep.subr.mxu0 0.0
        %635 = vmatpush1.msra.mxu0 0.0
        %636 = vmatprep.subr.mxu0 0.0
        %637 = vmatpush1.msra.mxu0 0.0
        %638 = vmatprep.subr.mxu0 0.0
        %639 = vmatpush1.msra.mxu0 0.0
        %v640 = vand.u32 %v217, 4294901760
        %641 = vmatprep.subr.mxu0 %v640
        %v642 = vand.u32 %v215, 4294901760
        %643 = vmatpush1.msra.mxu0 %v642
        %644 = vmatprep.subr.mxu0 0.0
        %645 = vmatpush2.msra.mxu0 0.0
        %646 = vmatprep.subr.mxu0 0.0
        %647 = vmatpush2.msra.mxu0 0.0
        %648 = vmatprep.subr.mxu0 0.0
        %649 = vmatpush2.msra.mxu0 0.0
        %650 = vmatprep.subr.mxu0 0.0
        %651 = vmatpush2.msra.mxu0 0.0
        %652 = vmatprep.subr.mxu0 0.0
        %653 = vmatpush2.msra.mxu0 0.0
        %654 = vmatprep.subr.mxu0 0.0
        %655 = vmatpush2.msra.mxu0 0.0
        %656 = vmatprep.subr.mxu0 0.0
        %657 = vmatpush2.msra.mxu0 0.0
        %658 = vmatprep.subr.mxu0 0.0
        %659 = vmatpush2.msra.mxu0 0.0
        %660 = vmatprep.subr.mxu0 0.0
        %661 = vmatpush2.msra.mxu0 0.0
        %662 = vmatprep.subr.mxu0 0.0
        %663 = vmatpush2.msra.mxu0 0.0
        %664 = vmatprep.subr.mxu0 0.0
        %665 = vmatpush2.msra.mxu0 0.0
        %666 = vmatprep.subr.mxu0 0.0
        %667 = vmatpush2.msra.mxu0 0.0
        %668 = vmatprep.subr.mxu0 0.0
        %669 = vmatpush2.msra.mxu0 0.0
        %670 = vmatprep.subr.mxu0 0.0
        %671 = vmatpush2.msra.mxu0 0.0
        %672 = vmatprep.subr.mxu0 0.0
        %673 = vmatpush2.msra.mxu0 0.0
        %674 = vmatprep.subr.mxu0 0.0
        %675 = vmatpush2.msra.mxu0 0.0
        %676 = vmatprep.mubr.f32.mxu0 0.0
        %v677 = vand.u32 %v212, 4294901760
        %678 = vmatmul.mubr.f32.gmra.mxu0 %v677
        %v679 = vpop.f32.mrf.mxu0
        %v680 = vadd.f32 %v606, %v679
        %v681 = vpop.f32.mrf.mxu0
        %v682 = vadd.f32 %v608, %v681
        %683 = vdwg.mxu0
        %684 = vst [vmem:[%s188] sm:$0xff] %v680
        %685 = vst [vmem:[%s188 + $0x8] sm:$0xff] %v682
        %s686 = sand.u32 %s109, 1
        %s687 = scalar_lea.sflag [#allocation3], %s686
        %s688 = sand.u32 %s109, 1
        %s689 = smul.addr %s688, 16
        %s690 = scalar_lea.vmem [#allocation2], %s689
        // Predicated region
        $region33: #{tpu_custom_call.1} parent=31 // pred_check
          %p691 = pneg %p119
        $region34: #{tpu_custom_call.1} parent=31 // pred_check_branch
          %693 = sbr.rel (%p691) target = $region36
        $region35: #{tpu_custom_call.1} parent=31 // pred_region
          %s694 = smul.u32 2, %s22
          %s696 = ssub.s32 256, 256
          %697 = vsyncadd %s687, %s696
          %s698 = smul.addr %s21, 2
          %s699 = sadd.s32 %s694, %s698
          %s700 = smul.addr %s699, 128
          %s701 = scalar_lea.hbm %s3, %s700
          %s703 = sshll.u32 %s690, 4
          %s704 = int_to_ptr.vmem [resolvable:$true] %s703
          %706 = dma.vmem_to_hbm [thread:$0]  %s704, 256, %s701, %s687
        $region36: #{tpu_custom_call.1} parent=31 // pred_fallthru
          _
      $region32: #{tpu_custom_call.1} parent=5 // pred_fallthru
        _
      %p707 = scmp.le.s32.totalorder 2, %s12
      // Predicated region
      $region37: #{tpu_custom_call.1} parent=5 // pred_check
        %p708 = pneg %p707
      $region38: #{tpu_custom_call.1} parent=5 // pred_check_branch
        %710 = sbr.rel (%p708) target = $region40
      $region39: #{tpu_custom_call.1} parent=5 // pred_region
        %s711 = ssub.s32 %s12, 2
        // Predicated region
        $region41: #{tpu_custom_call.1} parent=39 // pred_check
          %p712 = pneg %p125
        $region42: #{tpu_custom_call.1} parent=39 // pred_check_branch
          %714 = sbr.rel (%p712) target = $region44
        $region43: #{tpu_custom_call.1} parent=39 // pred_region
          %s715 = sand.u32 %s110, 1
          %s716 = scalar_lea.sflag [#allocation3], %s715
          %s717 = sand.u32 %s110, 1
          %s718 = smul.addr %s717, 16
          %s719 = scalar_lea.vmem [#allocation2], %s718
          %720 = dma.done %s716, 256
        $region44: #{tpu_custom_call.1} parent=39 // pred_fallthru
          _
      $region40: #{tpu_custom_call.1} parent=5 // pred_fallthru
        _
    $region6: #{tpu_custom_call.1} parent=1 // loop_footer
      %s16 = sadd.s32 1, %s12
    $region7: #{tpu_custom_call.1} parent=1 // loop_footer_branch
      %11 = sbr.rel target = $region3
    $region8: #{tpu_custom_call.1} parent=1 // loop_exit
      _
    %721 = vsyncpa [#allocation3], 1
    %s722 = scalar_lea.sflag [#allocation3], 1
    %723 = vsyncpa %s722, 1

</llo_original>
